<compile_context>
chip_gen: v7x
topology: tpu7x:2x2x1
jax: 0.10.0
libtpu: 0.0.40
codegen_flags: <defaults>
</compile_context>

<pallas_src>
import functools

import jax
import jax.numpy as jnp
from jax.experimental import pallas as pl
from jax.experimental.pallas import tpu as pltpu


def cnn_kernel(x_ref, w_ref, b_ref, out_ref, *, K, L, FP):
    # x_ref: (M, C) one batch element, time-major
    # w_ref: (K, C, FP) per-tap weight matrices (FP = F padded to 128)
    # b_ref: (1, FP)   out_ref: (1, FP)
    x = x_ref[...]                                    # (M, C)

    # Conv1d as K shifted 2-D matmuls on the MXU, f32 accumulation.
    s = jnp.zeros((L, FP), jnp.float32)
    for k in range(K):                                # K static & small -> unrolled
        s = s + jnp.dot(x[k:k + L, :], w_ref[k],
                        preferred_element_type=jnp.float32)

    # Max over time first; then bias + ReLU on a single (1, FP) row.
    # relu(max_l(s) + b) == max_l(relu(s + b))  (bias L-invariant, ReLU monotone)
    m = jnp.max(s, axis=0, keepdims=True)             # (1, FP)
    out_ref[...] = jnp.maximum(m + b_ref[...], 0.0).astype(out_ref.dtype)


@jax.jit
def cnn_forward(x, weight, bias):
    """x: (B, C, M) f32; weight: (F, C, K); bias: (F,). Returns (B, F)."""
    B, C, M = x.shape
    F, _, K = weight.shape
    L = M - K + 1
    FP = ((F + 127) // 128) * 128                     # lane-dense filter dim
    FP = max(FP, 128)

    # --- glue: tiny, same-size transforms only (no im2col / K-fold expansion) ---
    x_t = jnp.swapaxes(x, 1, 2)                       # (B, M, C) time-major
    w_t = jnp.transpose(weight, (2, 1, 0))            # (K, C, F)
    w_p = jnp.pad(w_t, ((0, 0), (0, 0), (0, FP - F))) # (K, C, FP)
    b_p = jnp.pad(bias, (0, FP - F)).reshape(1, FP)   # (1, FP)

    kernel = functools.partial(cnn_kernel, K=K, L=L, FP=FP)

    flops = 2 * B * L * C * K * F
    bytes_accessed = 4 * (x.size + w_p.size + b_p.size + B * FP)

    out3 = pl.pallas_call(
        kernel,
        out_shape=jax.ShapeDtypeStruct((B, 1, FP), x.dtype),
        grid=(B,),
        in_specs=[
            pl.BlockSpec((None, M, C), lambda b: (b, 0, 0)),   # one batch row
            pl.BlockSpec((K, C, FP), lambda b: (0, 0, 0)),     # full weights
            pl.BlockSpec((1, FP), lambda b: (0, 0)),           # bias row
        ],
        out_specs=pl.BlockSpec((None, 1, FP), lambda b: (b, 0, 0)),
        compiler_params=pltpu.CompilerParams(
            dimension_semantics=("parallel",)),
        cost_estimate=pl.CostEstimate(
            flops=flops, transcendentals=0, bytes_accessed=bytes_accessed),
    )(x_t, w_p, b_p)

    return out3[:, 0, :F]                             # drop lane padding -> (B, F)


def cnn_reference(x, weight, bias):
    # Pure-JAX reference mirroring torch.nn.Conv1d + ReLU + MaxPool1d + squeeze
    y = jax.lax.conv_general_dilated(
        x, weight, window_strides=(1,), padding="VALID",
        dimension_numbers=("NCH", "OIH", "NCH"))
    y = y + bias[None, :, None]
    y = jnp.maximum(y, 0.0)
    return jnp.max(y, axis=-1)


if __name__ == "__main__":
    # Module defaults: embed_size=50, m_word=21, k=5; choose f=64, batch=4.
    B, C, M, K, F = 4, 50, 21, 5, 64

    key = jax.random.PRNGKey(0)
    kx, kw, kb = jax.random.split(key, 3)
    x = jax.random.normal(kx, (B, C, M), dtype=jnp.float32)
    # deterministic Conv1d-style init (uniform in +/- 1/sqrt(C*K))
    bound = 1.0 / jnp.sqrt(jnp.float32(C * K))
    weight = jax.random.uniform(kw, (F, C, K), jnp.float32, -bound, bound)
    bias = jax.random.uniform(kb, (F,), jnp.float32, -bound, bound)

    out = jax.block_until_ready(cnn_forward(x, weight, bias))
    ref = jax.block_until_ready(cnn_reference(x, weight, bias))

    assert out.shape == (B, F), out.shape
    assert jnp.allclose(out, ref, atol=1e-4, rtol=1e-4), "mismatch vs reference"
    print("KERNEL_OK")
</pallas_src>

<mosaic_0001>
module attributes {stable_mosaic.version = 11 : i64} {
  func.func @cnn_kernel(%arg0: i32, %arg1: memref<1x21x50xf32, #tpu.memory_space<vmem>>, %arg2: memref<5x50x128xf32, #tpu.memory_space<vmem>>, %arg3: memref<1x128xf32, #tpu.memory_space<vmem>>, %arg4: memref<1x1x128xf32, #tpu.memory_space<vmem>>) attributes {dimension_semantics = [#tpu.dimension_semantics<parallel>], iteration_bounds = array<i64: 4>, scalar_prefetch = 0 : i64, scratch_operands = 0 : i64, tpu.core_type = #tpu.core_type<tc>, window_params = [{transform_indices = @transform_0, window_bounds = array<i64: 1, 21, 50>}, {pipeline_mode = #tpu.pipeline_mode<synchronous>, transform_indices = @transform_1, window_bounds = array<i64: 5, 50, 128>}, {pipeline_mode = #tpu.pipeline_mode<synchronous>, transform_indices = @transform_2, window_bounds = array<i64: 1, 128>}, {transform_indices = @transform_3, window_bounds = array<i64: 1, 1, 128>}]} {
    %c0 = arith.constant 0 : index
    %c0_0 = arith.constant 0 : index
    %c0_1 = arith.constant 0 : index
    %0 = vector.load %arg1[%c0, %c0_0, %c0_1] : memref<1x21x50xf32, #tpu.memory_space<vmem>>, vector<1x21x50xf32>
    %1 = vector.shape_cast %0 : vector<1x21x50xf32> to vector<21x50xf32>
    %cst = arith.constant 0.000000e+00 : f32
    %2 = vector.broadcast %cst : f32 to vector<17x128xf32>
    %3 = vector.extract_strided_slice %1 {offsets = [0, 0], sizes = [17, 50], strides = [1, 1]} : vector<21x50xf32> to vector<17x50xf32>
    %c0_2 = arith.constant 0 : index
    %c0_3 = arith.constant 0 : index
    %c0_4 = arith.constant 0 : index
    %4 = vector.load %arg2[%c0_2, %c0_3, %c0_4] : memref<5x50x128xf32, #tpu.memory_space<vmem>>, vector<1x50x128xf32>
    %5 = vector.shape_cast %4 : vector<1x50x128xf32> to vector<50x128xf32>
    %cst_5 = arith.constant dense<0.000000e+00> : vector<17x128xf32>
    %6 = tpu.matmul %3, %5, %cst_5 {dimension_numbers = #tpu.dot_dimension_numbers<[1], [0], [0], [1], [0, 0, 1, 1], [], []>} : vector<17x50xf32>, vector<50x128xf32>, vector<17x128xf32> -> vector<17x128xf32>
    %7 = arith.addf %2, %6 : vector<17x128xf32>
    %8 = vector.extract_strided_slice %1 {offsets = [1, 0], sizes = [17, 50], strides = [1, 1]} : vector<21x50xf32> to vector<17x50xf32>
    %c1 = arith.constant 1 : index
    %c0_6 = arith.constant 0 : index
    %c0_7 = arith.constant 0 : index
    %9 = vector.load %arg2[%c1, %c0_6, %c0_7] : memref<5x50x128xf32, #tpu.memory_space<vmem>>, vector<1x50x128xf32>
    %10 = vector.shape_cast %9 : vector<1x50x128xf32> to vector<50x128xf32>
    %cst_8 = arith.constant dense<0.000000e+00> : vector<17x128xf32>
    %11 = tpu.matmul %8, %10, %cst_8 {dimension_numbers = #tpu.dot_dimension_numbers<[1], [0], [0], [1], [0, 0, 1, 1], [], []>} : vector<17x50xf32>, vector<50x128xf32>, vector<17x128xf32> -> vector<17x128xf32>
    %12 = arith.addf %7, %11 : vector<17x128xf32>
    %13 = vector.extract_strided_slice %1 {offsets = [2, 0], sizes = [17, 50], strides = [1, 1]} : vector<21x50xf32> to vector<17x50xf32>
    %c2 = arith.constant 2 : index
    %c0_9 = arith.constant 0 : index
    %c0_10 = arith.constant 0 : index
    %14 = vector.load %arg2[%c2, %c0_9, %c0_10] : memref<5x50x128xf32, #tpu.memory_space<vmem>>, vector<1x50x128xf32>
    %15 = vector.shape_cast %14 : vector<1x50x128xf32> to vector<50x128xf32>
    %cst_11 = arith.constant dense<0.000000e+00> : vector<17x128xf32>
    %16 = tpu.matmul %13, %15, %cst_11 {dimension_numbers = #tpu.dot_dimension_numbers<[1], [0], [0], [1], [0, 0, 1, 1], [], []>} : vector<17x50xf32>, vector<50x128xf32>, vector<17x128xf32> -> vector<17x128xf32>
    %17 = arith.addf %12, %16 : vector<17x128xf32>
    %18 = vector.extract_strided_slice %1 {offsets = [3, 0], sizes = [17, 50], strides = [1, 1]} : vector<21x50xf32> to vector<17x50xf32>
    %c3 = arith.constant 3 : index
    %c0_12 = arith.constant 0 : index
    %c0_13 = arith.constant 0 : index
    %19 = vector.load %arg2[%c3, %c0_12, %c0_13] : memref<5x50x128xf32, #tpu.memory_space<vmem>>, vector<1x50x128xf32>
    %20 = vector.shape_cast %19 : vector<1x50x128xf32> to vector<50x128xf32>
    %cst_14 = arith.constant dense<0.000000e+00> : vector<17x128xf32>
    %21 = tpu.matmul %18, %20, %cst_14 {dimension_numbers = #tpu.dot_dimension_numbers<[1], [0], [0], [1], [0, 0, 1, 1], [], []>} : vector<17x50xf32>, vector<50x128xf32>, vector<17x128xf32> -> vector<17x128xf32>
    %22 = arith.addf %17, %21 : vector<17x128xf32>
    %23 = vector.extract_strided_slice %1 {offsets = [4, 0], sizes = [17, 50], strides = [1, 1]} : vector<21x50xf32> to vector<17x50xf32>
    %c4 = arith.constant 4 : index
    %c0_15 = arith.constant 0 : index
    %c0_16 = arith.constant 0 : index
    %24 = vector.load %arg2[%c4, %c0_15, %c0_16] : memref<5x50x128xf32, #tpu.memory_space<vmem>>, vector<1x50x128xf32>
    %25 = vector.shape_cast %24 : vector<1x50x128xf32> to vector<50x128xf32>
    %cst_17 = arith.constant dense<0.000000e+00> : vector<17x128xf32>
    %26 = tpu.matmul %23, %25, %cst_17 {dimension_numbers = #tpu.dot_dimension_numbers<[1], [0], [0], [1], [0, 0, 1, 1], [], []>} : vector<17x50xf32>, vector<50x128xf32>, vector<17x128xf32> -> vector<17x128xf32>
    %27 = arith.addf %22, %26 : vector<17x128xf32>
    %cst_18 = arith.constant dense<0xFF800000> : vector<128xf32>
    %28 = vector.multi_reduction <maximumf>, %27, %cst_18 [0] : vector<17x128xf32> to vector<128xf32>
    %29 = vector.shape_cast %28 : vector<128xf32> to vector<1x128xf32>
    %c0_19 = arith.constant 0 : index
    %c0_20 = arith.constant 0 : index
    %30 = vector.load %arg3[%c0_19, %c0_20] : memref<1x128xf32, #tpu.memory_space<vmem>>, vector<1x128xf32>
    %31 = arith.addf %29, %30 : vector<1x128xf32>
    %cst_21 = arith.constant 0.000000e+00 : f32
    %32 = vector.broadcast %cst_21 : f32 to vector<1x128xf32>
    %33 = arith.maximumf %31, %32 : vector<1x128xf32>
    %c0_22 = arith.constant 0 : index
    %c0_23 = arith.constant 0 : index
    %c0_24 = arith.constant 0 : index
    %34 = vector.load %arg4[%c0_22, %c0_23, %c0_24] : memref<1x1x128xf32, #tpu.memory_space<vmem>>, vector<1x1x128xf32>
    %35 = vector.shape_cast %34 : vector<1x1x128xf32> to vector<1x128xf32>
    %36 = vector.shape_cast %33 : vector<1x128xf32> to vector<1x1x128xf32>
    tpu.vector_store %arg4[%c0_22, %c0_23, %c0_24], %36 {strides = array<i32>} : memref<1x1x128xf32, #tpu.memory_space<vmem>>, vector<1x1x128xf32>,
    return
  }
  func.func @transform_0(%arg0: i32) -> (i32, i32, i32) {
    %c0_i32 = arith.constant 0 : i32
    %c0_i32_0 = arith.constant 0 : i32
    %c0_i32_1 = arith.constant 0 : i32
    return %arg0, %c0_i32, %c0_i32_0 : i32, i32, i32
  }
  func.func @transform_1(%arg0: i32) -> (i32, i32, i32) {
    %c0_i32 = arith.constant 0 : i32
    %c0_i32_0 = arith.constant 0 : i32
    %c0_i32_1 = arith.constant 0 : i32
    %c0_i32_2 = arith.constant 0 : i32
    return %c0_i32, %c0_i32_0, %c0_i32_1 : i32, i32, i32
  }
  func.func @transform_2(%arg0: i32) -> (i32, i32) {
    %c0_i32 = arith.constant 0 : i32
    %c0_i32_0 = arith.constant 0 : i32
    %c0_i32_1 = arith.constant 0 : i32
    return %c0_i32, %c0_i32_0 : i32, i32
  }
  func.func @transform_3(%arg0: i32) -> (i32, i32, i32) {
    %c0_i32 = arith.constant 0 : i32
    %c0_i32_0 = arith.constant 0 : i32
    %c0_i32_1 = arith.constant 0 : i32
    return %arg0, %c0_i32, %c0_i32_0 : i32, i32, i32
  }
}

</mosaic_0001>

<llo_original>
// kernel: cnn_forward.1
$region0: #{cnn_forward.1}
  #allocation0 [shape = 'u32[]', space=smem, size = 0x4, offset = 0x4, fixed_abs, tag = 'smem constant byte address 0x4 - core index']
  #allocation1 [shape = 'u32[144,128]{1,0:T(1,128)}', space=vmem, size = 0x12000, scoped, tag = 'internal scratch']
  %s0 = inlined_call_operand.vmem [shape: f32[4,21,50], index: 0, kind: input, shape index: {}]
  %s1 = inlined_call_operand.vmem [shape: f32[5,50,128], index: 1, kind: input, shape index: {}]
  %s2 = inlined_call_operand.vmem [shape: f32[1,128], index: 2, kind: input, shape index: {}]
  %s3 = inlined_call_operand.hbm [shape: f32[4,1,128], index: 3, kind: output, shape index: {}]
  %s4 = sld [smem:[#allocation0]]
  $region45: #{cnn_forward.1} parent=0
    _
  %s6 = ssub.s32 1, %s4
  %s7 = scalar_select 0, %s6, %s4
  $region1: #{cnn_forward.1} parent=0
    #allocation2 [shape = 'u8[1024]{0}', space=vmem, size = 0x400, scoped, tag = 'output window, operand 0']
    #allocation3 [shape = 's32[2]{0}', space=sflag, size = 0x8, scoped, tag = 'scoped memory for cnn_forward.1']
    %8 = vsyncpa [#allocation3], 0
    %s9 = scalar_lea.sflag [#allocation3], 1
    %10 = vsyncpa %s9, 0
    loop: start=0, step=1, limit=6
    $region2: #{cnn_forward.1} parent=1 // loop_pre_header
      _
    $region3: #{cnn_forward.1} parent=1 // loop_header
      %s12 = sphi 0, %s16
      %p13 = scmp.ge.s32.totalorder %s12, 6
      %s22 = sphi 0, %s24
      %s25 = sphi 0, %s22
      %s26 = sphi 0, %s25
      %s42 = sphi 0, %s26
      %s46 = sphi 0, %s46
      %s48 = sphi 0, %s46
      %s49 = sphi 0, %s48
      %s63 = sphi 0, %s49
      %s67 = sphi 0, %s67
      %s69 = sphi 0, %s67
      %s70 = sphi 0, %s69
      %s84 = sphi 0, %s70
      %s90 = sphi 0, %s92
      %s93 = sphi 0, %s90
      %s94 = sphi 0, %s93
      %s110 = sphi 0, %s94
    $region4: #{cnn_forward.1} parent=1 // loop_header_branch
      %15 = sbr.rel (%p13) target = $region8
    $region5: #{cnn_forward.1} parent=1 // loop_body
      %s17 = ssub.s32 %s12, 1
      %s18 = ssub.s32 %s12, 2
      %s19 = sadd.s32 %s12, 1
      %s20 = ssub.s32 %s12, %s19
      %p21 = scmp.eq.s32.totalorder %s20, 0
      %s23 = sadd.s32 %s22, 1
      %s24 = scalar_select %p21, %s22, %s23
      %p27 = pneg %p21
      %p28 = scmp.eq.s32.totalorder %s12, 3
      %p29 = por %p27, %p28
      %p30 = scmp.ne.s32.totalorder %s22, %s25
      %p31 = scmp.eq.s32.totalorder %s12, 0
      %p32 = por %p30, %p31
      %p33 = scmp.ne.s32.totalorder %s22, %s25
      %p34 = scmp.eq.s32.totalorder %s17, 3
      %p35 = por %p33, %p34
      %p36 = scmp.ne.s32.totalorder %s25, %s26
      %p37 = scmp.eq.s32.totalorder %s17, 0
      %p38 = por %p36, %p37
      %p39 = scmp.ne.s32.totalorder %s25, %s26
      %p40 = scmp.eq.s32.totalorder %s18, 3
      %p41 = por %p39, %p40
      %p43 = scmp.ne.s32.totalorder %s26, %s42
      %p44 = scmp.eq.s32.totalorder %s18, 0
      %p45 = por %p43, %p44
      %s47 = sadd.s32 %s46, 1
      %p50 = scmp.eq.s32.totalorder %s12, 3
      %p51 = scmp.ne.s32.totalorder %s46, %s48
      %p52 = scmp.eq.s32.totalorder %s12, 0
      %p53 = por %p51, %p52
      %p54 = scmp.ne.s32.totalorder %s46, %s48
      %p55 = scmp.eq.s32.totalorder %s17, 3
      %p56 = por %p54, %p55
      %p57 = scmp.ne.s32.totalorder %s48, %s49
      %p58 = scmp.eq.s32.totalorder %s17, 0
      %p59 = por %p57, %p58
      %p60 = scmp.ne.s32.totalorder %s48, %s49
      %p61 = scmp.eq.s32.totalorder %s18, 3
      %p62 = por %p60, %p61
      %p64 = scmp.ne.s32.totalorder %s49, %s63
      %p65 = scmp.eq.s32.totalorder %s18, 0
      %p66 = por %p64, %p65
      %s68 = sadd.s32 %s67, 1
      %p71 = scmp.eq.s32.totalorder %s12, 3
      %p72 = scmp.ne.s32.totalorder %s67, %s69
      %p73 = scmp.eq.s32.totalorder %s12, 0
      %p74 = por %p72, %p73
      %p75 = scmp.ne.s32.totalorder %s67, %s69
      %p76 = scmp.eq.s32.totalorder %s17, 3
      %p77 = por %p75, %p76
      %p78 = scmp.ne.s32.totalorder %s69, %s70
      %p79 = scmp.eq.s32.totalorder %s17, 0
      %p80 = por %p78, %p79
      %p81 = scmp.ne.s32.totalorder %s69, %s70
      %p82 = scmp.eq.s32.totalorder %s18, 3
      %p83 = por %p81, %p82
      %p85 = scmp.ne.s32.totalorder %s70, %s84
      %p86 = scmp.eq.s32.totalorder %s18, 0
      %p87 = por %p85, %p86
      %s88 = ssub.s32 %s12, %s19
      %p89 = scmp.eq.s32.totalorder %s88, 0
      %s91 = sadd.s32 %s90, 1
      %s92 = scalar_select %p89, %s90, %s91
      %p95 = pneg %p89
      %p96 = scmp.eq.s32.totalorder %s12, 3
      %p97 = por %p95, %p96
      %p98 = scmp.ne.s32.totalorder %s90, %s93
      %p99 = scmp.eq.s32.totalorder %s12, 0
      %p100 = por %p98, %p99
      %p101 = scmp.ne.s32.totalorder %s90, %s93
      %p102 = scmp.eq.s32.totalorder %s17, 3
      %p103 = por %p101, %p102
      %p104 = scmp.ne.s32.totalorder %s93, %s94
      %p105 = scmp.eq.s32.totalorder %s17, 0
      %p106 = por %p104, %p105
      %p107 = scmp.ne.s32.totalorder %s93, %s94
      %p108 = scmp.eq.s32.totalorder %s18, 3
      %p109 = por %p107, %p108
      %p111 = scmp.ne.s32.totalorder %s94, %s110
      %p112 = scmp.eq.s32.totalorder %s18, 0
      %p113 = por %p111, %p112
      %p114 = scmp.le.s32.totalorder 1, %s12
      %p115 = scmp.lt.s32.totalorder %s12, 5
      %p116 = pnand %p114, %p115
      %p117 = pneg %p116
      // Predicated region
      $region9: #{cnn_forward.1} parent=5 // pred_check
        _
      $region10: #{cnn_forward.1} parent=5 // pred_check_branch
        %119 = sbr.rel (%p116) target = $region12
      $region11: #{cnn_forward.1} parent=5 // pred_region
        %s120 = ssub.s32 %s12, 1
        // Predicated region
        $region13: #{cnn_forward.1} parent=11 // pred_check
          %p121 = pneg %p59
        $region14: #{cnn_forward.1} parent=11 // pred_check_branch
          %123 = sbr.rel (%p121) target = $region16
        $region15: #{cnn_forward.1} parent=11 // pred_region
          _
        $region16: #{cnn_forward.1} parent=11 // pred_fallthru
          _
        // Predicated region
        $region17: #{cnn_forward.1} parent=11 // pred_check
          %p124 = pneg %p80
        $region18: #{cnn_forward.1} parent=11 // pred_check_branch
          %126 = sbr.rel (%p124) target = $region20
        $region19: #{cnn_forward.1} parent=11 // pred_region
          _
        $region20: #{cnn_forward.1} parent=11 // pred_fallthru
          _
      $region12: #{cnn_forward.1} parent=5 // pred_fallthru
        _
      %p127 = scmp.lt.s32.totalorder %s12, 4
      // Predicated region
      $region21: #{cnn_forward.1} parent=5 // pred_check
        %p128 = pneg %p127
      $region22: #{cnn_forward.1} parent=5 // pred_check_branch
        %130 = sbr.rel (%p128) target = $region24
      $region23: #{cnn_forward.1} parent=5 // pred_region
        // Predicated region
        $region25: #{cnn_forward.1} parent=23 // pred_check
          %p131 = pneg %p32
        $region26: #{cnn_forward.1} parent=23 // pred_check_branch
          %133 = sbr.rel (%p131) target = $region28
        $region27: #{cnn_forward.1} parent=23 // pred_region
          %p134 = scmp.lt.s32.totalorder %s12, 3
          %s135 = scalar_select %p134, %s12, 3
          %s136 = smul.addr %s135, 3
          %s137 = smul.addr %s136, 8
          %s138 = scalar_lea.vmem %s0, %s137
        $region28: #{cnn_forward.1} parent=23 // pred_fallthru
          _
      $region24: #{cnn_forward.1} parent=5 // pred_fallthru
        _
      %p139 = scmp.le.s32.totalorder 1, %s12
      %p140 = scmp.lt.s32.totalorder %s12, 5
      %p141 = pnand %p139, %p140
      %p142 = pneg %p141
      // Predicated region
      $region29: #{cnn_forward.1} parent=5 // pred_check
        _
      $region30: #{cnn_forward.1} parent=5 // pred_check_branch
        %144 = sbr.rel (%p141) target = $region32
      $region31: #{cnn_forward.1} parent=5 // pred_region
        %s145 = ssub.s32 %s12, 1
        %p146 = scmp.lt.s32.totalorder %s17, 3
        %s147 = scalar_select %p146, %s17, 3
        %s148 = smul.addr %s147, 3
        %s149 = smul.addr %s148, 8
        %s150 = scalar_lea.vmem %s0, %s149
        %p151 = pneg %p38
        %p152 = pneg %p35
        %p153 = pneg %p59
        %p154 = pneg %p56
        %p155 = pneg %p80
        %p156 = pneg %p77
        %p157 = pneg %p106
        %p158 = pneg %p103
        %s159 = sand.u32 %s93, 1
        %s160 = scalar_lea.sflag [#allocation3], %s159
        %s161 = sand.u32 %s93, 1
        %s162 = scalar_lea.vmem [#allocation2], %s161
        %p163 = scmp.lt.s32.totalorder %s17, 3
        %s164 = scalar_select %p163, %s17, 3
        %s165 = smul.addr %s164, 3
        %s166 = smul.addr %s165, 8
        %s167 = scalar_lea.vmem %s0, %s166
        %v168 = vld [vmem:[%s167] sm:$0xff]
        %v169 = vld [vmem:[%s167 + $0x8] sm:$0xff]
        %v170 = vld [vmem:[%s167 + $0x10] sm:$0x1f]
        %v171 = vld [vmem:[%s1] sm:$0xff]
        %v172 = vld [vmem:[%s1 + $0x8] sm:$0xff]
        %v173 = vld [vmem:[%s1 + $0x10] sm:$0xff]
        %v174 = vld [vmem:[%s1 + $0x18] sm:$0xff]
        %v175 = vld [vmem:[%s1 + $0x20] sm:$0xff]
        %v176 = vld [vmem:[%s1 + $0x28] sm:$0xff]
        %v177 = vld [vmem:[%s1 + $0x30] sm:$0x3]
        %s178 = scalar_lea.vmem %s1, 56
        %v179 = vld [vmem:[%s178] sm:$0xff]
        %v180 = vld [vmem:[%s178 + $0x8] sm:$0xff]
        %v181 = vld [vmem:[%s178 + $0x10] sm:$0xff]
        %v182 = vld [vmem:[%s178 + $0x18] sm:$0xff]
        %v183 = vld [vmem:[%s178 + $0x20] sm:$0xff]
        %v184 = vld [vmem:[%s178 + $0x28] sm:$0xff]
        %v185 = vld [vmem:[%s178 + $0x30] sm:$0x3]
        %vm189 = vcmask 1046528
        %v190 = vrot.slane %v168, 1
        %v191 = vrot.slane %v169, 1
        %v192 = vsel %vm189, %v190, %v191
        %v193 = vrot.slane %v170, 1
        %v194 = vsel %vm189, %v191, %v193
        %vm195 = vcmask 408576
        %v196 = vsel %vm195, %v192, 0
        %v198 = vsel %vm195, %v194, 0
        %v200 = vsel %vm195, %v193, 0
        %vm202 = vcmask 1041408
        %v204 = vsel %vm202, %v185, 0
        %206 = vmatprep.subr.mxu0 0.0
        %207 = vmatpush1.msra.mxu0 %v179
        %208 = vmatprep.subr.mxu0 0.0
        %209 = vmatpush1.msra.mxu0 %v180
        %210 = vmatprep.subr.mxu0 0.0
        %211 = vmatpush1.msra.mxu0 %v181
        %212 = vmatprep.subr.mxu0 0.0
        %213 = vmatpush1.msra.mxu0 %v182
        %214 = vmatprep.subr.mxu0 0.0
        %215 = vmatpush1.msra.mxu0 %v183
        %216 = vmatprep.subr.mxu0 0.0
        %217 = vmatpush1.msra.mxu0 %v184
        %218 = vmatprep.subr.mxu0 0.0
        %219 = vmatpush1.msra.mxu0 %v204
        %220 = vmatprep.subr.mxu0 0.0
        %221 = vmatpush1.msra.mxu0 0.0
        %222 = vmatprep.subr.mxu0 0.0
        %223 = vmatpush1.msra.mxu0 0.0
        %224 = vmatprep.subr.mxu0 0.0
        %225 = vmatpush1.msra.mxu0 0.0
        %226 = vmatprep.subr.mxu0 0.0
        %227 = vmatpush1.msra.mxu0 0.0
        %228 = vmatprep.subr.mxu0 0.0
        %229 = vmatpush1.msra.mxu0 0.0
        %230 = vmatprep.subr.mxu0 0.0
        %231 = vmatpush1.msra.mxu0 0.0
        %232 = vmatprep.subr.mxu0 0.0
        %233 = vmatpush1.msra.mxu0 0.0
        %234 = vmatprep.subr.mxu0 0.0
        %235 = vmatpush1.msra.mxu0 0.0
        %236 = vmatprep.subr.mxu0 0.0
        %237 = vmatpush1.msra.mxu0 0.0
        %238 = vmatprep.subr.mxu0 0.0
        %239 = vmatpush1.msra.mxu0 0.0
        %240 = vmatprep.subr.mxu0 0.0
        %241 = vmatpush1.msra.mxu0 0.0
        %242 = vmatprep.subr.mxu0 0.0
        %243 = vmatpush1.msra.mxu0 0.0
        %244 = vmatprep.subr.mxu0 0.0
        %245 = vmatpush1.msra.mxu0 0.0
        %246 = vmatprep.subr.mxu0 0.0
        %247 = vmatpush1.msra.mxu0 0.0
        %248 = vmatprep.subr.mxu0 0.0
        %249 = vmatpush1.msra.mxu0 0.0
        %250 = vmatprep.subr.mxu0 0.0
        %251 = vmatpush1.msra.mxu0 0.0
        %252 = vmatprep.subr.mxu0 0.0
        %253 = vmatpush1.msra.mxu0 0.0
        %254 = vmatprep.subr.mxu0 0.0
        %255 = vmatpush1.msra.mxu0 0.0
        %256 = vmatprep.subr.mxu0 0.0
        %257 = vmatpush1.msra.mxu0 0.0
        %258 = vmatprep.subr.mxu0 0.0
        %259 = vmatpush1.msra.mxu0 0.0
        %260 = vmatprep.subr.mxu0 0.0
        %261 = vmatpush1.msra.mxu0 0.0
        %262 = vmatprep.subr.mxu0 0.0
        %263 = vmatpush1.msra.mxu0 0.0
        %264 = vmatprep.subr.mxu0 0.0
        %265 = vmatpush1.msra.mxu0 0.0
        %266 = vmatprep.subr.mxu0 0.0
        %267 = vmatpush1.msra.mxu0 0.0
        %268 = vmatprep.subr.mxu0 0.0
        %269 = vmatpush1.msra.mxu0 0.0
        %270 = vmatprep.mubr.f32.mxu0 0.0
        %271 = vmatmul.mubr.f32.gmra.mrb[0].mxu0 %v196
        %v272 = vpop.f32.mrb[0].mxu0
        %v273 = vadd.f32 0.0, %v272
        %v274 = vpop.f32.mrb[0].mxu0
        %275 = vmatprep.mubr.f32.mxu0 0.0
        %276 = vmatmul.mubr.f32.gmra.mrb[0].mxu0 %v198
        %v277 = vpop.f32.mrb[0].mxu0
        %v278 = vadd.f32 0.0, %v277
        %v279 = vpop.f32.mrb[0].mxu0
        %280 = vmatprep.mubr.f32.mxu0 0.0
        %281 = vmatmul.mubr.f32.gmra.mrb[0].mxu0 %v200
        %v282 = vpop.f32.mrb[0].mxu0
        %v283 = vadd.f32 0.0, %v282
        %v284 = vpop.f32.mrb[0].mxu0
        %285 = vdwg.mxu0
        %v286 = vsel %vm195, %v168, 0
        %v288 = vsel %vm195, %v169, 0
        %v290 = vsel %vm195, %v170, 0
        %v293 = vsel %vm202, %v177, 0
        %295 = vmatprep.subr.mxu0 0.0
        %296 = vmatpush1.msra.mxu0 %v171
        %297 = vmatprep.subr.mxu0 0.0
        %298 = vmatpush1.msra.mxu0 %v172
        %299 = vmatprep.subr.mxu0 0.0
        %300 = vmatpush1.msra.mxu0 %v173
        %301 = vmatprep.subr.mxu0 0.0
        %302 = vmatpush1.msra.mxu0 %v174
        %303 = vmatprep.subr.mxu0 0.0
        %304 = vmatpush1.msra.mxu0 %v175
        %305 = vmatprep.subr.mxu0 0.0
        %306 = vmatpush1.msra.mxu0 %v176
        %307 = vmatprep.subr.mxu0 0.0
        %308 = vmatpush1.msra.mxu0 %v293
        %309 = vmatprep.subr.mxu0 0.0
        %310 = vmatpush1.msra.mxu0 0.0
        %311 = vmatprep.subr.mxu0 0.0
        %312 = vmatpush1.msra.mxu0 0.0
        %313 = vmatprep.subr.mxu0 0.0
        %314 = vmatpush1.msra.mxu0 0.0
        %315 = vmatprep.subr.mxu0 0.0
        %316 = vmatpush1.msra.mxu0 0.0
        %317 = vmatprep.subr.mxu0 0.0
        %318 = vmatpush1.msra.mxu0 0.0
        %319 = vmatprep.subr.mxu0 0.0
        %320 = vmatpush1.msra.mxu0 0.0
        %321 = vmatprep.subr.mxu0 0.0
        %322 = vmatpush1.msra.mxu0 0.0
        %323 = vmatprep.subr.mxu0 0.0
        %324 = vmatpush1.msra.mxu0 0.0
        %325 = vmatprep.subr.mxu0 0.0
        %326 = vmatpush1.msra.mxu0 0.0
        %327 = vmatprep.subr.mxu0 0.0
        %328 = vmatpush1.msra.mxu0 0.0
        %329 = vmatprep.subr.mxu0 0.0
        %330 = vmatpush1.msra.mxu0 0.0
        %331 = vmatprep.subr.mxu0 0.0
        %332 = vmatpush1.msra.mxu0 0.0
        %333 = vmatprep.subr.mxu0 0.0
        %334 = vmatpush1.msra.mxu0 0.0
        %335 = vmatprep.subr.mxu0 0.0
        %336 = vmatpush1.msra.mxu0 0.0
        %337 = vmatprep.subr.mxu0 0.0
        %338 = vmatpush1.msra.mxu0 0.0
        %339 = vmatprep.subr.mxu0 0.0
        %340 = vmatpush1.msra.mxu0 0.0
        %341 = vmatprep.subr.mxu0 0.0
        %342 = vmatpush1.msra.mxu0 0.0
        %343 = vmatprep.subr.mxu0 0.0
        %344 = vmatpush1.msra.mxu0 0.0
        %345 = vmatprep.subr.mxu0 0.0
        %346 = vmatpush1.msra.mxu0 0.0
        %347 = vmatprep.subr.mxu0 0.0
        %348 = vmatpush1.msra.mxu0 0.0
        %349 = vmatprep.subr.mxu0 0.0
        %350 = vmatpush1.msra.mxu0 0.0
        %351 = vmatprep.subr.mxu0 0.0
        %352 = vmatpush1.msra.mxu0 0.0
        %353 = vmatprep.subr.mxu0 0.0
        %354 = vmatpush1.msra.mxu0 0.0
        %355 = vmatprep.subr.mxu0 0.0
        %356 = vmatpush1.msra.mxu0 0.0
        %357 = vmatprep.subr.mxu0 0.0
        %358 = vmatpush1.msra.mxu0 0.0
        %359 = vmatprep.mubr.f32.mxu0 0.0
        %360 = vmatmul.mubr.f32.gmra.mrb[0].mxu0 %v286
        %v361 = vpop.f32.mrb[0].mxu0
        %v362 = vadd.f32 %v273, %v361
        %v363 = vpop.f32.mrb[0].mxu0
        %364 = vmatprep.mubr.f32.mxu0 0.0
        %365 = vmatmul.mubr.f32.gmra.mrb[0].mxu0 %v288
        %v366 = vpop.f32.mrb[0].mxu0
        %v367 = vadd.f32 %v278, %v366
        %v368 = vpop.f32.mrb[0].mxu0
        %369 = vmatprep.mubr.f32.mxu0 0.0
        %370 = vmatmul.mubr.f32.gmra.mrb[0].mxu0 %v290
        %v371 = vpop.f32.mrb[0].mxu0
        %v372 = vadd.f32 %v283, %v371
        %v373 = vpop.f32.mrb[0].mxu0
        %374 = vdwg.mxu0
        %s375 = scalar_lea.vmem %s1, 112
        %v376 = vld [vmem:[%s375] sm:$0xff]
        %v377 = vld [vmem:[%s375 + $0x8] sm:$0xff]
        %v378 = vld [vmem:[%s375 + $0x10] sm:$0xff]
        %v379 = vld [vmem:[%s375 + $0x18] sm:$0xff]
        %v380 = vld [vmem:[%s375 + $0x20] sm:$0xff]
        %v381 = vld [vmem:[%s375 + $0x28] sm:$0xff]
        %v382 = vld [vmem:[%s375 + $0x30] sm:$0x3]
        %vm383 = vcmask 1045504
        %v384 = vrot.slane %v168, 2
        %v385 = vrot.slane %v169, 2
        %v386 = vsel %vm383, %v384, %v385
        %v387 = vrot.slane %v170, 2
        %v388 = vsel %vm383, %v385, %v387
        %v389 = vsel %vm195, %v386, 0
        %v391 = vsel %vm195, %v388, 0
        %v393 = vsel %vm195, %v387, 0
        %v396 = vsel %vm202, %v382, 0
        %398 = vmatprep.subr.mxu0 0.0
        %399 = vmatpush1.msra.mxu0 %v376
        %400 = vmatprep.subr.mxu0 0.0
        %401 = vmatpush1.msra.mxu0 %v377
        %402 = vmatprep.subr.mxu0 0.0
        %403 = vmatpush1.msra.mxu0 %v378
        %404 = vmatprep.subr.mxu0 0.0
        %405 = vmatpush1.msra.mxu0 %v379
        %406 = vmatprep.subr.mxu0 0.0
        %407 = vmatpush1.msra.mxu0 %v380
        %408 = vmatprep.subr.mxu0 0.0
        %409 = vmatpush1.msra.mxu0 %v381
        %410 = vmatprep.subr.mxu0 0.0
        %411 = vmatpush1.msra.mxu0 %v396
        %412 = vmatprep.subr.mxu0 0.0
        %413 = vmatpush1.msra.mxu0 0.0
        %414 = vmatprep.subr.mxu0 0.0
        %415 = vmatpush1.msra.mxu0 0.0
        %416 = vmatprep.subr.mxu0 0.0
        %417 = vmatpush1.msra.mxu0 0.0
        %418 = vmatprep.subr.mxu0 0.0
        %419 = vmatpush1.msra.mxu0 0.0
        %420 = vmatprep.subr.mxu0 0.0
        %421 = vmatpush1.msra.mxu0 0.0
        %422 = vmatprep.subr.mxu0 0.0
        %423 = vmatpush1.msra.mxu0 0.0
        %424 = vmatprep.subr.mxu0 0.0
        %425 = vmatpush1.msra.mxu0 0.0
        %426 = vmatprep.subr.mxu0 0.0
        %427 = vmatpush1.msra.mxu0 0.0
        %428 = vmatprep.subr.mxu0 0.0
        %429 = vmatpush1.msra.mxu0 0.0
        %430 = vmatprep.subr.mxu0 0.0
        %431 = vmatpush1.msra.mxu0 0.0
        %432 = vmatprep.subr.mxu0 0.0
        %433 = vmatpush1.msra.mxu0 0.0
        %434 = vmatprep.subr.mxu0 0.0
        %435 = vmatpush1.msra.mxu0 0.0
        %436 = vmatprep.subr.mxu0 0.0
        %437 = vmatpush1.msra.mxu0 0.0
        %438 = vmatprep.subr.mxu0 0.0
        %439 = vmatpush1.msra.mxu0 0.0
        %440 = vmatprep.subr.mxu0 0.0
        %441 = vmatpush1.msra.mxu0 0.0
        %442 = vmatprep.subr.mxu0 0.0
        %443 = vmatpush1.msra.mxu0 0.0
        %444 = vmatprep.subr.mxu0 0.0
        %445 = vmatpush1.msra.mxu0 0.0
        %446 = vmatprep.subr.mxu0 0.0
        %447 = vmatpush1.msra.mxu0 0.0
        %448 = vmatprep.subr.mxu0 0.0
        %449 = vmatpush1.msra.mxu0 0.0
        %450 = vmatprep.subr.mxu0 0.0
        %451 = vmatpush1.msra.mxu0 0.0
        %452 = vmatprep.subr.mxu0 0.0
        %453 = vmatpush1.msra.mxu0 0.0
        %454 = vmatprep.subr.mxu0 0.0
        %455 = vmatpush1.msra.mxu0 0.0
        %456 = vmatprep.subr.mxu0 0.0
        %457 = vmatpush1.msra.mxu0 0.0
        %458 = vmatprep.subr.mxu0 0.0
        %459 = vmatpush1.msra.mxu0 0.0
        %460 = vmatprep.subr.mxu0 0.0
        %461 = vmatpush1.msra.mxu0 0.0
        %462 = vmatprep.mubr.f32.mxu0 0.0
        %463 = vmatmul.mubr.f32.gmra.mrb[0].mxu0 %v389
        %v464 = vpop.f32.mrb[0].mxu0
        %v465 = vadd.f32 0.0, %v464
        %v466 = vpop.f32.mrb[0].mxu0
        %467 = vmatprep.mubr.f32.mxu0 0.0
        %468 = vmatmul.mubr.f32.gmra.mrb[0].mxu0 %v391
        %v469 = vpop.f32.mrb[0].mxu0
        %v470 = vadd.f32 0.0, %v469
        %v471 = vpop.f32.mrb[0].mxu0
        %472 = vmatprep.mubr.f32.mxu0 0.0
        %473 = vmatmul.mubr.f32.gmra.mrb[0].mxu0 %v393
        %v474 = vpop.f32.mrb[0].mxu0
        %v475 = vadd.f32 0.0, %v474
        %v476 = vpop.f32.mrb[0].mxu0
        %477 = vdwg.mxu0
        %v478 = vadd.f32 %v362, %v465
        %v479 = vadd.f32 %v367, %v470
        %v480 = vadd.f32 %v372, %v475
        %s481 = scalar_lea.vmem %s1, 168
        %v482 = vld [vmem:[%s481] sm:$0xff]
        %v483 = vld [vmem:[%s481 + $0x8] sm:$0xff]
        %v484 = vld [vmem:[%s481 + $0x10] sm:$0xff]
        %v485 = vld [vmem:[%s481 + $0x18] sm:$0xff]
        %v486 = vld [vmem:[%s481 + $0x20] sm:$0xff]
        %v487 = vld [vmem:[%s481 + $0x28] sm:$0xff]
        %v488 = vld [vmem:[%s481 + $0x30] sm:$0x3]
        %vm489 = vcmask 1044480
        %v490 = vrot.slane %v168, 3
        %v491 = vrot.slane %v169, 3
        %v492 = vsel %vm489, %v490, %v491
        %v493 = vrot.slane %v170, 3
        %v494 = vsel %vm489, %v491, %v493
        %v495 = vsel %vm195, %v492, 0
        %v497 = vsel %vm195, %v494, 0
        %v499 = vsel %vm195, %v493, 0
        %v502 = vsel %vm202, %v488, 0
        %504 = vmatprep.subr.mxu0 0.0
        %505 = vmatpush1.msra.mxu0 %v482
        %506 = vmatprep.subr.mxu0 0.0
        %507 = vmatpush1.msra.mxu0 %v483
        %508 = vmatprep.subr.mxu0 0.0
        %509 = vmatpush1.msra.mxu0 %v484
        %510 = vmatprep.subr.mxu0 0.0
        %511 = vmatpush1.msra.mxu0 %v485
        %512 = vmatprep.subr.mxu0 0.0
        %513 = vmatpush1.msra.mxu0 %v486
        %514 = vmatprep.subr.mxu0 0.0
        %515 = vmatpush1.msra.mxu0 %v487
        %516 = vmatprep.subr.mxu0 0.0
        %517 = vmatpush1.msra.mxu0 %v502
        %518 = vmatprep.subr.mxu0 0.0
        %519 = vmatpush1.msra.mxu0 0.0
        %520 = vmatprep.subr.mxu0 0.0
        %521 = vmatpush1.msra.mxu0 0.0
        %522 = vmatprep.subr.mxu0 0.0
        %523 = vmatpush1.msra.mxu0 0.0
        %524 = vmatprep.subr.mxu0 0.0
        %525 = vmatpush1.msra.mxu0 0.0
        %526 = vmatprep.subr.mxu0 0.0
        %527 = vmatpush1.msra.mxu0 0.0
        %528 = vmatprep.subr.mxu0 0.0
        %529 = vmatpush1.msra.mxu0 0.0
        %530 = vmatprep.subr.mxu0 0.0
        %531 = vmatpush1.msra.mxu0 0.0
        %532 = vmatprep.subr.mxu0 0.0
        %533 = vmatpush1.msra.mxu0 0.0
        %534 = vmatprep.subr.mxu0 0.0
        %535 = vmatpush1.msra.mxu0 0.0
        %536 = vmatprep.subr.mxu0 0.0
        %537 = vmatpush1.msra.mxu0 0.0
        %538 = vmatprep.subr.mxu0 0.0
        %539 = vmatpush1.msra.mxu0 0.0
        %540 = vmatprep.subr.mxu0 0.0
        %541 = vmatpush1.msra.mxu0 0.0
        %542 = vmatprep.subr.mxu0 0.0
        %543 = vmatpush1.msra.mxu0 0.0
        %544 = vmatprep.subr.mxu0 0.0
        %545 = vmatpush1.msra.mxu0 0.0
        %546 = vmatprep.subr.mxu0 0.0
        %547 = vmatpush1.msra.mxu0 0.0
        %548 = vmatprep.subr.mxu0 0.0
        %549 = vmatpush1.msra.mxu0 0.0
        %550 = vmatprep.subr.mxu0 0.0
        %551 = vmatpush1.msra.mxu0 0.0
        %552 = vmatprep.subr.mxu0 0.0
        %553 = vmatpush1.msra.mxu0 0.0
        %554 = vmatprep.subr.mxu0 0.0
        %555 = vmatpush1.msra.mxu0 0.0
        %556 = vmatprep.subr.mxu0 0.0
        %557 = vmatpush1.msra.mxu0 0.0
        %558 = vmatprep.subr.mxu0 0.0
        %559 = vmatpush1.msra.mxu0 0.0
        %560 = vmatprep.subr.mxu0 0.0
        %561 = vmatpush1.msra.mxu0 0.0
        %562 = vmatprep.subr.mxu0 0.0
        %563 = vmatpush1.msra.mxu0 0.0
        %564 = vmatprep.subr.mxu0 0.0
        %565 = vmatpush1.msra.mxu0 0.0
        %566 = vmatprep.subr.mxu0 0.0
        %567 = vmatpush1.msra.mxu0 0.0
        %568 = vmatprep.mubr.f32.mxu0 0.0
        %569 = vmatmul.mubr.f32.gmra.mrb[0].mxu0 %v495
        %v570 = vpop.f32.mrb[0].mxu0
        %v571 = vadd.f32 0.0, %v570
        %v572 = vpop.f32.mrb[0].mxu0
        %573 = vmatprep.mubr.f32.mxu0 0.0
        %574 = vmatmul.mubr.f32.gmra.mrb[0].mxu0 %v497
        %v575 = vpop.f32.mrb[0].mxu0
        %v576 = vadd.f32 0.0, %v575
        %v577 = vpop.f32.mrb[0].mxu0
        %578 = vmatprep.mubr.f32.mxu0 0.0
        %579 = vmatmul.mubr.f32.gmra.mrb[0].mxu0 %v499
        %v580 = vpop.f32.mrb[0].mxu0
        %v581 = vadd.f32 0.0, %v580
        %v582 = vpop.f32.mrb[0].mxu0
        %583 = vdwg.mxu0
        %v584 = vadd.f32 %v478, %v571
        %v585 = vadd.f32 %v479, %v576
        %v586 = vadd.f32 %v480, %v581
        %s587 = scalar_lea.vmem %s1, 224
        %v588 = vld [vmem:[%s587] sm:$0xff]
        %v589 = vld [vmem:[%s587 + $0x8] sm:$0xff]
        %v590 = vld [vmem:[%s587 + $0x10] sm:$0xff]
        %v591 = vld [vmem:[%s587 + $0x18] sm:$0xff]
        %v592 = vld [vmem:[%s587 + $0x20] sm:$0xff]
        %v593 = vld [vmem:[%s587 + $0x28] sm:$0xff]
        %v594 = vld [vmem:[%s587 + $0x30] sm:$0x3]
        %vm595 = vcmask 1043456
        %v596 = vrot.slane %v168, 4
        %v597 = vrot.slane %v169, 4
        %v598 = vsel %vm595, %v596, %v597
        %v599 = vrot.slane %v170, 4
        %v600 = vsel %vm595, %v597, %v599
        %v601 = vsel %vm195, %v598, 0
        %v603 = vsel %vm195, %v600, 0
        %v605 = vsel %vm195, %v599, 0
        %v608 = vsel %vm202, %v594, 0
        %610 = vmatprep.subr.mxu0 0.0
        %611 = vmatpush1.msra.mxu0 %v588
        %612 = vmatprep.subr.mxu0 0.0
        %613 = vmatpush1.msra.mxu0 %v589
        %614 = vmatprep.subr.mxu0 0.0
        %615 = vmatpush1.msra.mxu0 %v590
        %616 = vmatprep.subr.mxu0 0.0
        %617 = vmatpush1.msra.mxu0 %v591
        %618 = vmatprep.subr.mxu0 0.0
        %619 = vmatpush1.msra.mxu0 %v592
        %620 = vmatprep.subr.mxu0 0.0
        %621 = vmatpush1.msra.mxu0 %v593
        %622 = vmatprep.subr.mxu0 0.0
        %623 = vmatpush1.msra.mxu0 %v608
        %624 = vmatprep.subr.mxu0 0.0
        %625 = vmatpush1.msra.mxu0 0.0
        %626 = vmatprep.subr.mxu0 0.0
        %627 = vmatpush1.msra.mxu0 0.0
        %628 = vmatprep.subr.mxu0 0.0
        %629 = vmatpush1.msra.mxu0 0.0
        %630 = vmatprep.subr.mxu0 0.0
        %631 = vmatpush1.msra.mxu0 0.0
        %632 = vmatprep.subr.mxu0 0.0
        %633 = vmatpush1.msra.mxu0 0.0
        %634 = vmatprep.subr.mxu0 0.0
        %635 = vmatpush1.msra.mxu0 0.0
        %636 = vmatprep.subr.mxu0 0.0
        %637 = vmatpush1.msra.mxu0 0.0
        %638 = vmatprep.subr.mxu0 0.0
        %639 = vmatpush1.msra.mxu0 0.0
        %640 = vmatprep.subr.mxu0 0.0
        %641 = vmatpush1.msra.mxu0 0.0
        %642 = vmatprep.subr.mxu0 0.0
        %643 = vmatpush1.msra.mxu0 0.0
        %644 = vmatprep.subr.mxu0 0.0
        %645 = vmatpush1.msra.mxu0 0.0
        %646 = vmatprep.subr.mxu0 0.0
        %647 = vmatpush1.msra.mxu0 0.0
        %648 = vmatprep.subr.mxu0 0.0
        %649 = vmatpush1.msra.mxu0 0.0
        %650 = vmatprep.subr.mxu0 0.0
        %651 = vmatpush1.msra.mxu0 0.0
        %652 = vmatprep.subr.mxu0 0.0
        %653 = vmatpush1.msra.mxu0 0.0
        %654 = vmatprep.subr.mxu0 0.0
        %655 = vmatpush1.msra.mxu0 0.0
        %656 = vmatprep.subr.mxu0 0.0
        %657 = vmatpush1.msra.mxu0 0.0
        %658 = vmatprep.subr.mxu0 0.0
        %659 = vmatpush1.msra.mxu0 0.0
        %660 = vmatprep.subr.mxu0 0.0
        %661 = vmatpush1.msra.mxu0 0.0
        %662 = vmatprep.subr.mxu0 0.0
        %663 = vmatpush1.msra.mxu0 0.0
        %664 = vmatprep.subr.mxu0 0.0
        %665 = vmatpush1.msra.mxu0 0.0
        %666 = vmatprep.subr.mxu0 0.0
        %667 = vmatpush1.msra.mxu0 0.0
        %668 = vmatprep.subr.mxu0 0.0
        %669 = vmatpush1.msra.mxu0 0.0
        %670 = vmatprep.subr.mxu0 0.0
        %671 = vmatpush1.msra.mxu0 0.0
        %672 = vmatprep.subr.mxu0 0.0
        %673 = vmatpush1.msra.mxu0 0.0
        %674 = vmatprep.mubr.f32.mxu0 0.0
        %675 = vmatmul.mubr.f32.gmra.mrb[0].mxu0 %v601
        %v676 = vpop.f32.mrb[0].mxu0
        %v677 = vadd.f32 0.0, %v676
        %v678 = vpop.f32.mrb[0].mxu0
        %679 = vmatprep.mubr.f32.mxu0 0.0
        %680 = vmatmul.mubr.f32.gmra.mrb[0].mxu0 %v603
        %v681 = vpop.f32.mrb[0].mxu0
        %v682 = vadd.f32 0.0, %v681
        %v683 = vpop.f32.mrb[0].mxu0
        %684 = vmatprep.mubr.f32.mxu0 0.0
        %685 = vmatmul.mubr.f32.gmra.mrb[0].mxu0 %v605
        %v686 = vpop.f32.mrb[0].mxu0
        %v687 = vadd.f32 0.0, %v686
        %v688 = vpop.f32.mrb[0].mxu0
        %689 = vdwg.mxu0
        %v690 = vadd.f32 %v584, %v677
        %v691 = vadd.f32 %v585, %v682
        %v692 = vadd.f32 %v586, %v687
        %vm693 = vcmask 1040384
        %v694 = vsel %vm693, %v692, -inf
        %v695 = vmax.f32 %v690, %v691
        %v696 = vmax.f32 %v695, %v694
        %v697 = vrot.slane %v696, 4
        %v698 = vmax.f32 %v696, %v697
        %v699 = vrot.slane %v698, 2
        %v700 = vmax.f32 %v698, %v699
        %v701 = vrot.slane %v700, 1
        %v702 = vmax.f32 %v700, %v701
        %v703 = vld [vmem:[%s2] sm:$0x1]
        %v704 = vadd.f32 %v702, %v703
        %v705 = vmax.f32 %v704, 0.0
        %706 = vst [vmem:[%s162] sm:$0x1] %v705
        %s707 = sand.u32 %s93, 1
        %s708 = scalar_lea.sflag [#allocation3], %s707
        %s709 = sand.u32 %s93, 1
        %s710 = scalar_lea.vmem [#allocation2], %s709
        // Predicated region
        $region33: #{cnn_forward.1} parent=31 // pred_check
          %p711 = pneg %p103
        $region34: #{cnn_forward.1} parent=31 // pred_check_branch
          %713 = sbr.rel (%p711) target = $region36
        $region35: #{cnn_forward.1} parent=31 // pred_region
          %s715 = ssub.s32 16, 16
          %716 = vsyncadd %s708, %s715
          %s717 = smul.addr %s17, 16
          %s718 = scalar_lea.hbm %s3, %s717
          %s720 = sshll.u32 %s710, 4
          %s721 = int_to_ptr.vmem [resolvable:$true] %s720
          %723 = dma.vmem_to_hbm [thread:$0]  %s721, 16, %s718, %s708
        $region36: #{cnn_forward.1} parent=31 // pred_fallthru
          _
      $region32: #{cnn_forward.1} parent=5 // pred_fallthru
        _
      %p724 = scmp.le.s32.totalorder 2, %s12
      // Predicated region
      $region37: #{cnn_forward.1} parent=5 // pred_check
        %p725 = pneg %p724
      $region38: #{cnn_forward.1} parent=5 // pred_check_branch
        %727 = sbr.rel (%p725) target = $region40
      $region39: #{cnn_forward.1} parent=5 // pred_region
        %s728 = ssub.s32 %s12, 2
        // Predicated region
        $region41: #{cnn_forward.1} parent=39 // pred_check
          %p729 = pneg %p109
        $region42: #{cnn_forward.1} parent=39 // pred_check_branch
          %731 = sbr.rel (%p729) target = $region44
        $region43: #{cnn_forward.1} parent=39 // pred_region
          %s732 = sand.u32 %s94, 1
          %s733 = scalar_lea.sflag [#allocation3], %s732
          %s734 = sand.u32 %s94, 1
          %s735 = scalar_lea.vmem [#allocation2], %s734
          %736 = dma.done %s733, 16
        $region44: #{cnn_forward.1} parent=39 // pred_fallthru
          _
      $region40: #{cnn_forward.1} parent=5 // pred_fallthru
        _
    $region6: #{cnn_forward.1} parent=1 // loop_footer
      %s16 = sadd.s32 1, %s12
    $region7: #{cnn_forward.1} parent=1 // loop_footer_branch
      %11 = sbr.rel target = $region3
    $region8: #{cnn_forward.1} parent=1 // loop_exit
      _
    %737 = vsyncpa [#allocation3], 1
    %s738 = scalar_lea.sflag [#allocation3], 1
    %739 = vsyncpa %s738, 1

</llo_original>
